<compile_context>
chip_gen: v6e
topology: v6e:2x2x1
jax: 0.10.0
libtpu: 0.0.40
codegen_flags: <defaults>
</compile_context>

<pallas_src>
import jax
import jax.numpy as jnp
from jax import lax
from jax.experimental import pallas as pl
from jax.experimental.pallas import tpu as pltpu

# Problem sizes (small, consistent with the module's forward)
N = 2          # batch
CIN = 4        # inplanes
CMID = 8       # planes (!= inplanes -> shortcut conv1x1+BN active)
H = W = 16     # spatial

NH = N * H           # slab rows (32)
LIN = W * CIN        # input slab lanes (64)
LMID = W * CMID      # mid/output slab lanes (128, fully lane-dense)


def resblock_kernel(x_ref, w1_ref, w2_ref, wsc_ref, bias_ref, out_ref):
    """Single VMEM-resident invocation.

    x_ref    : (NH, LIN)       bf16 input slab (row = n*H + y, lane = x*CIN + c)
    w1_ref   : (3, LIN, LMID)  bf16 per-ky conv1 slab weights (bn1 scale + dx folded)
    w2_ref   : (3, LMID, LMID) bf16 per-ky conv2 slab weights (bn2 scale + dx folded)
    wsc_ref  : (LIN, LMID)     bf16 shortcut 1x1 slab weights (bn scale folded)
    bias_ref : (2, LMID)       f32 [b1 ; b2 + bsc] folded-BN shifts, lane layout
    out_ref  : (NH, LMID)      f32 lane-dense output slab
    """
    x = x_ref[...]                                   # bf16 MXU operand
    bias = bias_ref[...]                             # (2, LMID) f32

    # Border / batch-boundary masks for the dy = +/-1 conv taps.
    y = lax.broadcasted_iota(jnp.int32, (NH, 1), 0) % H
    not_top = y != 0          # rows where row r-1 belongs to the same image
    not_bot = y != (H - 1)    # rows where row r+1 belongs to the same image

    def shift_rows(a, dy):
        # out[r] = a[r + dy]; zero where the tap falls outside the image
        # (y borders; also kills cross-batch leakage since r = n*H + y).
        rolled = pltpu.roll(a, (-dy) % NH, axis=0)   # XLU sublane rotate, static
        return jnp.where(not_top if dy < 0 else not_bot, rolled, 0.0)

    # ---- conv1 + folded bn1: three per-ky matmuls; dy shift applied to the
    #      f32 outputs (row shift commutes with the per-row matmul -> exact) ----
    p0 = jnp.dot(x, w1_ref[0], preferred_element_type=jnp.float32)
    p1 = jnp.dot(x, w1_ref[1], preferred_element_type=jnp.float32)
    p2 = jnp.dot(x, w1_ref[2], preferred_element_type=jnp.float32)
    acc1 = shift_rows(p0, -1) + p1 + shift_rows(p2, +1) + bias[0:1, :]
    h1 = jnp.maximum(acc1, 0.0).astype(jnp.bfloat16)   # ReLU; single bf16 rounding

    # ---- conv2 + folded bn2 (same per-ky structure, K = 128 per pass) ----
    q0 = jnp.dot(h1, w2_ref[0], preferred_element_type=jnp.float32)
    q1 = jnp.dot(h1, w2_ref[1], preferred_element_type=jnp.float32)
    q2 = jnp.dot(h1, w2_ref[2], preferred_element_type=jnp.float32)

    # ---- shortcut: conv1x1 (block-diagonal slab weight, bn scale folded) ----
    ident = jnp.dot(x, wsc_ref[...], preferred_element_type=jnp.float32)

    # ---- residual add + combined (b2 + bsc) bias + final ReLU;
    #      unmasked 128-lane store ----
    acc2 = shift_rows(q0, -1) + q1 + shift_rows(q2, +1) + ident + bias[1:2, :]
    out_ref[...] = jnp.maximum(acc2, 0.0)


# --------------- one-time parameter / layout preparation (per layer) ---------------

def prepare_resblock_params(w1_hwio, s1, b1, w2_hwio, s2, b2, wsc, ssc, bsc):
    """Fold BN scales into the conv weights, build the kron'd slab matrices and
    pack the biases. Run once per layer (weights are static) -- NOT in the
    per-call hot path."""
    def conv_slab(w_hwio, scale, cin, cout):
        # (3,3,cin,cout) -> (3, W*cin, W*cout): per-ky slab weights with the folded
        # BN output-channel scale, and the kx shift + x zero padding folded in via
        # kron with a shifted identity (S_dx[x_in, x_out] = 1 iff x_in == x_out+dx).
        w = w_hwio.astype(jnp.float32) * scale[None, None, None, :]
        blocks = []
        for ky in range(3):
            blk = jnp.zeros((W * cin, W * cout), jnp.float32)
            for kx in range(3):
                dx = kx - 1
                shift_eye = jnp.eye(W, k=-dx, dtype=jnp.float32)
                blk = blk + jnp.kron(shift_eye, w[ky, kx])
            blocks.append(blk)
        return jnp.stack(blocks).astype(jnp.bfloat16)

    w1_slab = conv_slab(w1_hwio, s1, CIN, CMID)                  # (3, LIN, LMID)
    w2_slab = conv_slab(w2_hwio, s2, CMID, CMID)                 # (3, LMID, LMID)
    wsc_slab = jnp.kron(jnp.eye(W, dtype=jnp.float32),
                        wsc.astype(jnp.float32) * ssc[None, :]   # (LIN, LMID)
                        ).astype(jnp.bfloat16)
    bias = jnp.stack([jnp.tile(b1, W),                           # lane l = x*C + c
                      jnp.tile(b2 + bsc, W)]).astype(jnp.float32)  # (2, LMID)
    return w1_slab, w2_slab, wsc_slab, bias


def _cost_estimate():
    flops = 2 * NH * (3 * LIN * LMID + 3 * LMID * LMID + LIN * LMID)
    bytes_accessed = (NH * LIN * 2            # x (bf16)
                      + 3 * LIN * LMID * 2    # w1
                      + 3 * LMID * LMID * 2   # w2
                      + LIN * LMID * 2        # wsc
                      + 2 * LMID * 4          # biases
                      + NH * LMID * 4)        # out
    return pl.CostEstimate(flops=flops, transcendentals=0,
                           bytes_accessed=bytes_accessed)


@jax.jit
def resblock_pallas(x_nhwc, w1_slab, w2_slab, wsc_slab, bias):
    # Lane-dense slab layout: row = n*H + y, lane = x*C + c.
    x_slab = x_nhwc.reshape(NH, LIN).astype(jnp.bfloat16)
    vmem = pl.BlockSpec(memory_space=pltpu.MemorySpace.VMEM)
    out_slab = pl.pallas_call(
        resblock_kernel,
        out_shape=jax.ShapeDtypeStruct((NH, LMID), jnp.float32),
        in_specs=[vmem] * 5,
        out_specs=vmem,
        cost_estimate=_cost_estimate(),
    )(x_slab, w1_slab, w2_slab, wsc_slab, bias)
    return out_slab.reshape(N, H, W, CMID)


# ---------------- pure-JAX reference (inference-mode BN, stride=1) ----------------

def resblock_ref(x_nhwc, w1_hwio, s1, b1, w2_hwio, s2, b2, wsc, ssc, bsc):
    conv = lambda x, w: lax.conv_general_dilated(
        x, w, window_strides=(1, 1), padding="SAME",
        dimension_numbers=("NHWC", "HWIO", "NHWC"),
        precision=lax.Precision.HIGHEST)
    h = jnp.maximum(conv(x_nhwc, w1_hwio) * s1 + b1, 0.0)
    out = conv(h, w2_hwio) * s2 + b2
    ident = jnp.einsum("nhwc,cd->nhwd", x_nhwc, wsc,
                       precision=lax.Precision.HIGHEST) * ssc + bsc
    return jnp.maximum(out + ident, 0.0)


if __name__ == "__main__":
    key = jax.random.PRNGKey(0)
    ks = jax.random.split(key, 16)

    def bf16_exact(a):
        # Make test data exactly bf16-representable so the kernel's default-precision
        # (single-pass bf16) MXU matmuls only differ from the f32 reference through
        # the folded-BN weight rounding and the in-kernel h1 rounding.
        return a.astype(jnp.bfloat16).astype(jnp.float32)

    # Input in PyTorch NCHW convention
    x_nchw = bf16_exact(jax.random.normal(ks[0], (N, CIN, H, W), jnp.float32))

    # Conv weights (created directly in HWIO / (CIN, CMID))
    w1_hwio = bf16_exact(0.2 * jax.random.normal(ks[1], (3, 3, CIN, CMID), jnp.float32))
    w2_hwio = bf16_exact(0.2 * jax.random.normal(ks[2], (3, 3, CMID, CMID), jnp.float32))
    wsc = bf16_exact(0.2 * jax.random.normal(ks[3], (CIN, CMID), jnp.float32))

    def bn_fold(kg, kb, km, kv, c, eps=1e-5):
        gamma = 1.0 + 0.1 * jax.random.normal(kg, (c,), jnp.float32)
        beta = 0.1 * jax.random.normal(kb, (c,), jnp.float32)
        mean = 0.1 * jax.random.normal(km, (c,), jnp.float32)
        var = 1.0 + 0.1 * jax.random.uniform(kv, (c,), jnp.float32)
        scale = gamma / jnp.sqrt(var + eps)
        shift = beta - mean * scale
        return scale, shift

    s1, b1 = bn_fold(ks[4], ks[5], ks[6], ks[7], CMID)
    s2, b2 = bn_fold(ks[8], ks[9], ks[10], ks[11], CMID)
    ssc, bsc = bn_fold(ks[12], ks[13], ks[14], ks[15], CMID)

    # NCHW -> NHWC at the boundary (glue in plain JAX)
    x_nhwc = jnp.transpose(x_nchw, (0, 2, 3, 1))

    # One-time layer prep (outside the jitted hot path)
    params = prepare_resblock_params(w1_hwio, s1, b1, w2_hwio, s2, b2,
                                     wsc, ssc, bsc)
    params = jax.tree_util.tree_map(jax.block_until_ready, params)

    out = resblock_pallas(x_nhwc, *params)
    out = jax.block_until_ready(out)

    ref = resblock_ref(x_nhwc, w1_hwio, s1, b1, w2_hwio, s2, b2, wsc, ssc, bsc)
    assert out.shape == (N, H, W, CMID)
    err = float(jnp.max(jnp.abs(out - ref)))
    # Tolerance covers bf16 rounding of the BN-scale-folded conv weights (the folded
    # products are no longer exactly bf16-representable) plus the single bf16
    # rounding of the h1 intermediate: expected max |err| around 1e-2.
    # Structural bugs produce errors O(0.1+).
    assert jnp.allclose(out, ref, atol=3e-2, rtol=1e-2), f"max abs err = {err}"
    print("KERNEL_OK")
</pallas_src>

<mosaic_0001>
module attributes {stable_mosaic.version = 11 : i64} {
  func.func @resblock_kernel(%arg0: memref<32x64xbf16, #tpu.memory_space<vmem>>, %arg1: memref<3x64x128xbf16, #tpu.memory_space<vmem>>, %arg2: memref<3x128x128xbf16, #tpu.memory_space<vmem>>, %arg3: memref<64x128xbf16, #tpu.memory_space<vmem>>, %arg4: memref<2x128xf32, #tpu.memory_space<vmem>>, %arg5: memref<32x128xf32, #tpu.memory_space<vmem>>) attributes {dimension_semantics = [], scalar_prefetch = 0 : i64, scratch_operands = 0 : i64, tpu.core_type = #tpu.core_type<tc>} {
    %c0 = arith.constant 0 : index
    %c0_0 = arith.constant 0 : index
    %0 = vector.load %arg0[%c0, %c0_0] : memref<32x64xbf16, #tpu.memory_space<vmem>>, vector<32x64xbf16>
    %c0_1 = arith.constant 0 : index
    %c0_2 = arith.constant 0 : index
    %1 = vector.load %arg4[%c0_1, %c0_2] : memref<2x128xf32, #tpu.memory_space<vmem>>, vector<2x128xf32>
    %2 = tpu.iota {dimensions = array<i32: 0>} : vector<32x1xi32>
    %c16_i32 = arith.constant 16 : i32
    %c0_i32 = arith.constant 0 : i32
    %3 = arith.cmpi eq, %c16_i32, %c0_i32 : i32
    %c1_i32 = arith.constant 1 : i32
    %4 = arith.select %3, %c1_i32, %c16_i32 : i32
    %5 = vector.broadcast %4 : i32 to vector<32x1xi32>
    %6 = arith.remsi %2, %5 : vector<32x1xi32>
    %c0_i32_3 = arith.constant 0 : i32
    %7 = vector.broadcast %c0_i32_3 : i32 to vector<32x1xi32>
    %8 = arith.cmpi ne, %6, %7 : vector<32x1xi32>
    %c0_i32_4 = arith.constant 0 : i32
    %9 = vector.broadcast %c0_i32_4 : i32 to vector<32x1xi32>
    %10 = arith.cmpi slt, %6, %9 : vector<32x1xi32>
    %c0_i32_5 = arith.constant 0 : i32
    %11 = arith.cmpi slt, %4, %c0_i32_5 : i32
    %12 = vector.broadcast %11 : i1 to vector<32x1xi1>
    %13 = vector.broadcast %12 : vector<32x1xi1> to vector<32x1xi1>
    %14 = arith.xori %10, %13 : vector<32x1xi1>
    %15 = arith.andi %14, %8 : vector<32x1xi1>
    %16 = vector.broadcast %4 : i32 to vector<32x1xi32>
    %17 = arith.addi %6, %16 : vector<32x1xi32>
    %18 = arith.select %15, %17, %6 : vector<32x1xi1>, vector<32x1xi32>
    %c0_i32_6 = arith.constant 0 : i32
    %19 = vector.broadcast %c0_i32_6 : i32 to vector<32x1xi32>
    %20 = arith.cmpi ne, %18, %19 : vector<32x1xi32>
    %c15_i32 = arith.constant 15 : i32
    %21 = vector.broadcast %c15_i32 : i32 to vector<32x1xi32>
    %22 = arith.cmpi ne, %18, %21 : vector<32x1xi32>
    %c0_7 = arith.constant 0 : index
    %c0_8 = arith.constant 0 : index
    %c0_9 = arith.constant 0 : index
    %23 = vector.load %arg1[%c0_7, %c0_8, %c0_9] : memref<3x64x128xbf16, #tpu.memory_space<vmem>>, vector<1x64x128xbf16>
    %24 = vector.shape_cast %23 : vector<1x64x128xbf16> to vector<64x128xbf16>
    %cst = arith.constant dense<0.000000e+00> : vector<32x128xf32>
    %25 = tpu.matmul %0, %24, %cst {dimension_numbers = #tpu.dot_dimension_numbers<[1], [0], [0], [1], [0, 0, 1, 1], [], []>} : vector<32x64xbf16>, vector<64x128xbf16>, vector<32x128xf32> -> vector<32x128xf32>
    %c1 = arith.constant 1 : index
    %c0_10 = arith.constant 0 : index
    %c0_11 = arith.constant 0 : index
    %26 = vector.load %arg1[%c1, %c0_10, %c0_11] : memref<3x64x128xbf16, #tpu.memory_space<vmem>>, vector<1x64x128xbf16>
    %27 = vector.shape_cast %26 : vector<1x64x128xbf16> to vector<64x128xbf16>
    %cst_12 = arith.constant dense<0.000000e+00> : vector<32x128xf32>
    %28 = tpu.matmul %0, %27, %cst_12 {dimension_numbers = #tpu.dot_dimension_numbers<[1], [0], [0], [1], [0, 0, 1, 1], [], []>} : vector<32x64xbf16>, vector<64x128xbf16>, vector<32x128xf32> -> vector<32x128xf32>
    %c2 = arith.constant 2 : index
    %c0_13 = arith.constant 0 : index
    %c0_14 = arith.constant 0 : index
    %29 = vector.load %arg1[%c2, %c0_13, %c0_14] : memref<3x64x128xbf16, #tpu.memory_space<vmem>>, vector<1x64x128xbf16>
    %30 = vector.shape_cast %29 : vector<1x64x128xbf16> to vector<64x128xbf16>
    %cst_15 = arith.constant dense<0.000000e+00> : vector<32x128xf32>
    %31 = tpu.matmul %0, %30, %cst_15 {dimension_numbers = #tpu.dot_dimension_numbers<[1], [0], [0], [1], [0, 0, 1, 1], [], []>} : vector<32x64xbf16>, vector<64x128xbf16>, vector<32x128xf32> -> vector<32x128xf32>
    %c1_i32_16 = arith.constant 1 : i32
    %32 = tpu.dynamic_rotate %25 by %c1_i32_16 dim 0 : vector<32x128xf32>, i32 -> vector<32x128xf32>
    %cst_17 = arith.constant 0.000000e+00 : f32
    %33 = vector.shape_cast %20 : vector<32x1xi1> to vector<32x1xi1>
    %34 = vector.broadcast %33 : vector<32x1xi1> to vector<32x128xi1>
    %35 = vector.broadcast %cst_17 : f32 to vector<32x128xf32>
    %36 = arith.select %34, %32, %35 : vector<32x128xi1>, vector<32x128xf32>
    %37 = arith.addf %36, %28 : vector<32x128xf32>
    %c31_i32 = arith.constant 31 : i32
    %38 = tpu.dynamic_rotate %31 by %c31_i32 dim 0 : vector<32x128xf32>, i32 -> vector<32x128xf32>
    %cst_18 = arith.constant 0.000000e+00 : f32
    %39 = vector.shape_cast %22 : vector<32x1xi1> to vector<32x1xi1>
    %40 = vector.broadcast %39 : vector<32x1xi1> to vector<32x128xi1>
    %41 = vector.broadcast %cst_18 : f32 to vector<32x128xf32>
    %42 = arith.select %40, %38, %41 : vector<32x128xi1>, vector<32x128xf32>
    %43 = arith.addf %37, %42 : vector<32x128xf32>
    %44 = vector.extract_strided_slice %1 {offsets = [0, 0], sizes = [1, 128], strides = [1, 1]} : vector<2x128xf32> to vector<1x128xf32>
    %45 = vector.broadcast %44 : vector<1x128xf32> to vector<32x128xf32>
    %46 = arith.addf %43, %45 : vector<32x128xf32>
    %cst_19 = arith.constant 0.000000e+00 : f32
    %47 = vector.broadcast %cst_19 : f32 to vector<32x128xf32>
    %48 = arith.maximumf %46, %47 : vector<32x128xf32>
    %49 = arith.truncf %48 : vector<32x128xf32> to vector<32x128xbf16>
    %c0_20 = arith.constant 0 : index
    %c0_21 = arith.constant 0 : index
    %c0_22 = arith.constant 0 : index
    %50 = vector.load %arg2[%c0_20, %c0_21, %c0_22] : memref<3x128x128xbf16, #tpu.memory_space<vmem>>, vector<1x128x128xbf16>
    %51 = vector.shape_cast %50 : vector<1x128x128xbf16> to vector<128x128xbf16>
    %cst_23 = arith.constant dense<0.000000e+00> : vector<32x128xf32>
    %52 = tpu.matmul %49, %51, %cst_23 {dimension_numbers = #tpu.dot_dimension_numbers<[1], [0], [0], [1], [0, 0, 1, 1], [], []>} : vector<32x128xbf16>, vector<128x128xbf16>, vector<32x128xf32> -> vector<32x128xf32>
    %c1_24 = arith.constant 1 : index
    %c0_25 = arith.constant 0 : index
    %c0_26 = arith.constant 0 : index
    %53 = vector.load %arg2[%c1_24, %c0_25, %c0_26] : memref<3x128x128xbf16, #tpu.memory_space<vmem>>, vector<1x128x128xbf16>
    %54 = vector.shape_cast %53 : vector<1x128x128xbf16> to vector<128x128xbf16>
    %cst_27 = arith.constant dense<0.000000e+00> : vector<32x128xf32>
    %55 = tpu.matmul %49, %54, %cst_27 {dimension_numbers = #tpu.dot_dimension_numbers<[1], [0], [0], [1], [0, 0, 1, 1], [], []>} : vector<32x128xbf16>, vector<128x128xbf16>, vector<32x128xf32> -> vector<32x128xf32>
    %c2_28 = arith.constant 2 : index
    %c0_29 = arith.constant 0 : index
    %c0_30 = arith.constant 0 : index
    %56 = vector.load %arg2[%c2_28, %c0_29, %c0_30] : memref<3x128x128xbf16, #tpu.memory_space<vmem>>, vector<1x128x128xbf16>
    %57 = vector.shape_cast %56 : vector<1x128x128xbf16> to vector<128x128xbf16>
    %cst_31 = arith.constant dense<0.000000e+00> : vector<32x128xf32>
    %58 = tpu.matmul %49, %57, %cst_31 {dimension_numbers = #tpu.dot_dimension_numbers<[1], [0], [0], [1], [0, 0, 1, 1], [], []>} : vector<32x128xbf16>, vector<128x128xbf16>, vector<32x128xf32> -> vector<32x128xf32>
    %c0_32 = arith.constant 0 : index
    %c0_33 = arith.constant 0 : index
    %59 = vector.load %arg3[%c0_32, %c0_33] : memref<64x128xbf16, #tpu.memory_space<vmem>>, vector<64x128xbf16>
    %cst_34 = arith.constant dense<0.000000e+00> : vector<32x128xf32>
    %60 = tpu.matmul %0, %59, %cst_34 {dimension_numbers = #tpu.dot_dimension_numbers<[1], [0], [0], [1], [0, 0, 1, 1], [], []>} : vector<32x64xbf16>, vector<64x128xbf16>, vector<32x128xf32> -> vector<32x128xf32>
    %c1_i32_35 = arith.constant 1 : i32
    %61 = tpu.dynamic_rotate %52 by %c1_i32_35 dim 0 : vector<32x128xf32>, i32 -> vector<32x128xf32>
    %cst_36 = arith.constant 0.000000e+00 : f32
    %62 = vector.shape_cast %20 : vector<32x1xi1> to vector<32x1xi1>
    %63 = vector.broadcast %62 : vector<32x1xi1> to vector<32x128xi1>
    %64 = vector.broadcast %cst_36 : f32 to vector<32x128xf32>
    %65 = arith.select %63, %61, %64 : vector<32x128xi1>, vector<32x128xf32>
    %66 = arith.addf %65, %55 : vector<32x128xf32>
    %c31_i32_37 = arith.constant 31 : i32
    %67 = tpu.dynamic_rotate %58 by %c31_i32_37 dim 0 : vector<32x128xf32>, i32 -> vector<32x128xf32>
    %cst_38 = arith.constant 0.000000e+00 : f32
    %68 = vector.shape_cast %22 : vector<32x1xi1> to vector<32x1xi1>
    %69 = vector.broadcast %68 : vector<32x1xi1> to vector<32x128xi1>
    %70 = vector.broadcast %cst_38 : f32 to vector<32x128xf32>
    %71 = arith.select %69, %67, %70 : vector<32x128xi1>, vector<32x128xf32>
    %72 = arith.addf %66, %71 : vector<32x128xf32>
    %73 = arith.addf %72, %60 : vector<32x128xf32>
    %74 = vector.extract_strided_slice %1 {offsets = [1, 0], sizes = [1, 128], strides = [1, 1]} : vector<2x128xf32> to vector<1x128xf32>
    %75 = vector.broadcast %74 : vector<1x128xf32> to vector<32x128xf32>
    %76 = arith.addf %73, %75 : vector<32x128xf32>
    %cst_39 = arith.constant 0.000000e+00 : f32
    %77 = vector.broadcast %cst_39 : f32 to vector<32x128xf32>
    %78 = arith.maximumf %76, %77 : vector<32x128xf32>
    %c0_40 = arith.constant 0 : index
    %c0_41 = arith.constant 0 : index
    %79 = vector.load %arg5[%c0_40, %c0_41] : memref<32x128xf32, #tpu.memory_space<vmem>>, vector<32x128xf32>
    tpu.vector_store %arg5[%c0_40, %c0_41], %78 {strides = array<i32>} : memref<32x128xf32, #tpu.memory_space<vmem>>, vector<32x128xf32>,
    return
  }
}

</mosaic_0001>

<llo_original>
// kernel: resblock_pallas.1
$region0: #{resblock_pallas.1}
  #allocation0 [shape = 'u32[]', space=smem, size = 0x4, offset = 0x4, fixed_abs, tag = 'smem constant byte address 0x4 - core index']
  #allocation1 [shape = 'u32[144,128]{1,0:T(1,128)}', space=vmem, size = 0x12000, scoped, tag = 'internal scratch']
  %s0 = inlined_call_operand.vmem [shape: bf16[32,64], index: 0, kind: input, shape index: {}]
  %s1 = inlined_call_operand.vmem [shape: bf16[3,64,128], index: 1, kind: input, shape index: {}]
  %s2 = inlined_call_operand.vmem [shape: bf16[3,128,128], index: 2, kind: input, shape index: {}]
  %s3 = inlined_call_operand.vmem [shape: bf16[64,128], index: 3, kind: input, shape index: {}]
  %s4 = inlined_call_operand.vmem [shape: f32[2,128], index: 4, kind: input, shape index: {}]
  %s5 = inlined_call_operand.vmem [shape: f32[32,128], index: 5, kind: output, shape index: {}]
  %s6 = sld [smem:[#allocation0]]
  $region30: #{resblock_pallas.1} parent=0
    _
  %s8 = ssub.s32 1, %s6
  %s9 = scalar_select 0, %s8, %s6
  // Predicated region
  $region2: #{resblock_pallas.1} parent=0 // pred_check
    _
  $region3: #{resblock_pallas.1} parent=0 // pred_check_branch
    %11 = sbr.rel (0) target = $region5
  $region4: #{resblock_pallas.1} parent=0 // pred_region
    _
  $region5: #{resblock_pallas.1} parent=0 // pred_fallthru
    _
  // Predicated region
  $region6: #{resblock_pallas.1} parent=0 // pred_check
    _
  $region7: #{resblock_pallas.1} parent=0 // pred_check_branch
    %13 = sbr.rel (0) target = $region9
  $region8: #{resblock_pallas.1} parent=0 // pred_region
    _
  $region9: #{resblock_pallas.1} parent=0 // pred_fallthru
    _
  // Predicated region
  $region10: #{resblock_pallas.1} parent=0 // pred_check
    _
  $region11: #{resblock_pallas.1} parent=0 // pred_check_branch
    %15 = sbr.rel (0) target = $region13
  $region12: #{resblock_pallas.1} parent=0 // pred_region
    _
  $region13: #{resblock_pallas.1} parent=0 // pred_fallthru
    _
  // Predicated region
  $region14: #{resblock_pallas.1} parent=0 // pred_check
    _
  $region15: #{resblock_pallas.1} parent=0 // pred_check_branch
    %17 = sbr.rel (0) target = $region17
  $region16: #{resblock_pallas.1} parent=0 // pred_region
    _
  $region17: #{resblock_pallas.1} parent=0 // pred_fallthru
    _
  // Predicated region
  $region18: #{resblock_pallas.1} parent=0 // pred_check
    _
  $region19: #{resblock_pallas.1} parent=0 // pred_check_branch
    %19 = sbr.rel (0) target = $region21
  $region20: #{resblock_pallas.1} parent=0 // pred_region
    _
  $region21: #{resblock_pallas.1} parent=0 // pred_fallthru
    _
  %v21 = vld [vmem:[%s0] sm:$0xf]
  %v22 = vld [vmem:[%s0 + $0x4] sm:$0xf]
  %v23 = vld [vmem:[%s0 + $0x8] sm:$0xf]
  %v24 = vld [vmem:[%s0 + $0xc] sm:$0xf]
  %v25 = vld [vmem:[%s4] sm:$0x3]
  %v26 = vlaneseq
  %v27 = vshrl.u32 %v26, 7
  %v28 = vadd.s32 %v27, 8
  %v29 = vadd.s32 %v27, 16
  %v30 = vadd.s32 %v27, 24
  %vm31 = vcmp.lt.s32.totalorder %v27, 0
  %v32 = vsub.s32 0, %v27
  %v33 = vsel %vm31, %v32, %v27
  %v34 = vshrl.u32 %v33, 4
  %v35 = vand.u32 %v33, 15
  %v36 = vsub.s32 0, %v35
  %v37 = vsel %vm31, %v36, %v35
  %vm38 = vcmp.lt.s32.totalorder %v28, 0
  %v39 = vsub.s32 0, %v28
  %v40 = vsel %vm38, %v39, %v28
  %v41 = vshrl.u32 %v40, 4
  %v42 = vand.u32 %v40, 15
  %v43 = vsub.s32 0, %v42
  %v44 = vsel %vm38, %v43, %v42
  %vm45 = vcmp.lt.s32.totalorder %v29, 0
  %v46 = vsub.s32 0, %v29
  %v47 = vsel %vm45, %v46, %v29
  %v48 = vshrl.u32 %v47, 4
  %v49 = vand.u32 %v47, 15
  %v50 = vsub.s32 0, %v49
  %v51 = vsel %vm45, %v50, %v49
  %vm52 = vcmp.lt.s32.totalorder %v30, 0
  %v53 = vsub.s32 0, %v30
  %v54 = vsel %vm52, %v53, %v30
  %v55 = vshrl.u32 %v54, 4
  %v56 = vand.u32 %v54, 15
  %v57 = vsub.s32 0, %v56
  %v58 = vsel %vm52, %v57, %v56
  %vm59 = vcmp.ne.s32.totalorder %v37, 0
  %vm60 = vcmp.ne.s32.totalorder %v44, 0
  %vm61 = vcmp.ne.s32.totalorder %v51, 0
  %vm62 = vcmp.ne.s32.totalorder %v58, 0
  %vm63 = vcmp.lt.s32.totalorder %v37, 0
  %vm64 = vcmp.lt.s32.totalorder %v44, 0
  %vm65 = vcmp.lt.s32.totalorder %v51, 0
  %vm66 = vcmp.lt.s32.totalorder %v58, 0
  %vm67 = vmand %vm63, %vm59
  %vm68 = vmand %vm64, %vm60
  %vm69 = vmand %vm65, %vm61
  %vm70 = vmand %vm66, %vm62
  %v71 = vadd.s32 %v37, 16
  %v72 = vadd.s32 %v44, 16
  %v73 = vadd.s32 %v51, 16
  %v74 = vadd.s32 %v58, 16
  %v75 = vsel %vm67, %v71, %v37
  %v76 = vsel %vm68, %v72, %v44
  %v77 = vsel %vm69, %v73, %v51
  %v78 = vsel %vm70, %v74, %v58
  %vm79 = vcmp.ne.s32.totalorder %v75, 0
  %vm80 = vcmp.ne.s32.totalorder %v76, 0
  %vm81 = vcmp.ne.s32.totalorder %v77, 0
  %vm82 = vcmp.ne.s32.totalorder %v78, 0
  %vm83 = vcmp.ne.s32.totalorder %v75, 15
  %vm84 = vcmp.ne.s32.totalorder %v76, 15
  %vm85 = vcmp.ne.s32.totalorder %v77, 15
  %vm86 = vcmp.ne.s32.totalorder %v78, 15
  %v87 = vld [vmem:[%s1] sm:$0xf]
  %v88 = vld [vmem:[%s1 + $0x4] sm:$0xf]
  %v89 = vld [vmem:[%s1 + $0x8] sm:$0xf]
  %v90 = vld [vmem:[%s1 + $0xc] sm:$0xf]
  %v91 = vld [vmem:[%s1 + $0x10] sm:$0xf]
  %v92 = vld [vmem:[%s1 + $0x14] sm:$0xf]
  %v93 = vld [vmem:[%s1 + $0x18] sm:$0xf]
  %v94 = vld [vmem:[%s1 + $0x1c] sm:$0xf]
  %v99 = vunpack.c.l.b16 %v21
  %v100 = vunpack.c.l.b16 %v22
  %v101 = vunpack.c.l.b16 %v23
  %v102 = vunpack.c.l.b16 %v24
  %v103 = vpack.c.b16 %v100, %v99
  %v104 = vpack.c.b16 %v102, %v101
  %v113 = vunpack.c.l.b16 %v87
  %v114 = vunpack.c.l.b16 %v88
  %v115 = vunpack.c.l.b16 %v89
  %v116 = vunpack.c.l.b16 %v90
  %v117 = vunpack.c.l.b16 %v91
  %v118 = vunpack.c.l.b16 %v92
  %v119 = vunpack.c.l.b16 %v93
  %v120 = vunpack.c.l.b16 %v94
  %v121 = vpack.c.b16 %v114, %v113
  %v122 = vpack.c.b16 %v116, %v115
  %v123 = vpack.c.b16 %v118, %v117
  %v124 = vpack.c.b16 %v120, %v119
  %vm129 = vcmask 523264
  %v131 = vsel %vm129, %v103, 0
  %v134 = vsel %vm129, %v104, 0
  %136 = vmatprep.subr.bf16.mxu0 0
  %137 = vmatpush1.bf16.msra.mxu0 0
  %138 = vmatprep.subr.bf16.mxu0 0
  %139 = vmatpush1.bf16.msra.mxu0 0
  %140 = vmatprep.subr.bf16.mxu0 0
  %141 = vmatpush1.bf16.msra.mxu0 0
  %142 = vmatprep.subr.bf16.mxu0 0
  %143 = vmatpush1.bf16.msra.mxu0 0
  %144 = vmatprep.subr.bf16.mxu0 0
  %145 = vmatpush1.bf16.msra.mxu0 %v124
  %146 = vmatprep.subr.bf16.mxu0 0
  %147 = vmatpush1.bf16.msra.mxu0 %v123
  %148 = vmatprep.subr.bf16.mxu0 0
  %149 = vmatpush1.bf16.msra.mxu0 %v122
  %150 = vmatprep.subr.bf16.mxu0 0
  %151 = vmatpush1.bf16.msra.mxu0 %v121
  %152 = vmatprep.subr.bf16.mxu0 0
  %153 = vmatpush2.bf16.msra.mxu0 0
  %154 = vmatprep.subr.bf16.mxu0 0
  %155 = vmatpush2.bf16.msra.mxu0 0
  %156 = vmatprep.subr.bf16.mxu0 0
  %157 = vmatpush2.bf16.msra.mxu0 0
  %158 = vmatprep.subr.bf16.mxu0 0
  %159 = vmatpush2.bf16.msra.mxu0 0
  %160 = vmatprep.subr.bf16.mxu0 0
  %161 = vmatpush2.bf16.msra.mxu0 0
  %162 = vmatprep.subr.bf16.mxu0 0
  %163 = vmatpush2.bf16.msra.mxu0 0
  %164 = vmatprep.subr.bf16.mxu0 0
  %165 = vmatpush2.bf16.msra.mxu0 0
  %166 = vmatprep.subr.bf16.mxu0 0
  %167 = vmatpush2.bf16.msra.mxu0 0
  %168 = vmatprep.mubr.bf16.mxu0 0
  %169 = vmatmul.mubr.bf16.gmra.mxu0 %v131
  %v170 = vpop.f32.mrf.mxu0
  %v171 = vadd.f32 0.0, %v170
  %v172 = vpop.f32.mrf.mxu0
  %v173 = vpop.f32.mrf.mxu0
  %v174 = vadd.f32 0.0, %v173
  %v175 = vpop.f32.mrf.mxu0
  %176 = vmatprep.mubr.bf16.mxu0 0
  %177 = vmatmul.mubr.bf16.gmra.mxu0 %v134
  %v178 = vpop.f32.mrf.mxu0
  %v179 = vadd.f32 0.0, %v178
  %v180 = vpop.f32.mrf.mxu0
  %v181 = vpop.f32.mrf.mxu0
  %v182 = vadd.f32 0.0, %v181
  %v183 = vpop.f32.mrf.mxu0
  %184 = vdwg.mxu0
  %s185 = scalar_lea.vmem %s1, 32
  %v186 = vld [vmem:[%s185] sm:$0xf]
  %v187 = vld [vmem:[%s185 + $0x4] sm:$0xf]
  %v188 = vld [vmem:[%s185 + $0x8] sm:$0xf]
  %v189 = vld [vmem:[%s185 + $0xc] sm:$0xf]
  %v190 = vld [vmem:[%s185 + $0x10] sm:$0xf]
  %v191 = vld [vmem:[%s185 + $0x14] sm:$0xf]
  %v192 = vld [vmem:[%s185 + $0x18] sm:$0xf]
  %v193 = vld [vmem:[%s185 + $0x1c] sm:$0xf]
  %v202 = vunpack.c.l.b16 %v186
  %v203 = vunpack.c.l.b16 %v187
  %v204 = vunpack.c.l.b16 %v188
  %v205 = vunpack.c.l.b16 %v189
  %v206 = vunpack.c.l.b16 %v190
  %v207 = vunpack.c.l.b16 %v191
  %v208 = vunpack.c.l.b16 %v192
  %v209 = vunpack.c.l.b16 %v193
  %v210 = vpack.c.b16 %v203, %v202
  %v211 = vpack.c.b16 %v205, %v204
  %v212 = vpack.c.b16 %v207, %v206
  %v213 = vpack.c.b16 %v209, %v208
  %218 = vmatprep.subr.bf16.mxu0 0
  %219 = vmatpush1.bf16.msra.mxu0 0
  %220 = vmatprep.subr.bf16.mxu0 0
  %221 = vmatpush1.bf16.msra.mxu0 0
  %222 = vmatprep.subr.bf16.mxu0 0
  %223 = vmatpush1.bf16.msra.mxu0 0
  %224 = vmatprep.subr.bf16.mxu0 0
  %225 = vmatpush1.bf16.msra.mxu0 0
  %226 = vmatprep.subr.bf16.mxu0 0
  %227 = vmatpush1.bf16.msra.mxu0 %v213
  %228 = vmatprep.subr.bf16.mxu0 0
  %229 = vmatpush1.bf16.msra.mxu0 %v212
  %230 = vmatprep.subr.bf16.mxu0 0
  %231 = vmatpush1.bf16.msra.mxu0 %v211
  %232 = vmatprep.subr.bf16.mxu0 0
  %233 = vmatpush1.bf16.msra.mxu0 %v210
  %234 = vmatprep.subr.bf16.mxu0 0
  %235 = vmatpush2.bf16.msra.mxu0 0
  %236 = vmatprep.subr.bf16.mxu0 0
  %237 = vmatpush2.bf16.msra.mxu0 0
  %238 = vmatprep.subr.bf16.mxu0 0
  %239 = vmatpush2.bf16.msra.mxu0 0
  %240 = vmatprep.subr.bf16.mxu0 0
  %241 = vmatpush2.bf16.msra.mxu0 0
  %242 = vmatprep.subr.bf16.mxu0 0
  %243 = vmatpush2.bf16.msra.mxu0 0
  %244 = vmatprep.subr.bf16.mxu0 0
  %245 = vmatpush2.bf16.msra.mxu0 0
  %246 = vmatprep.subr.bf16.mxu0 0
  %247 = vmatpush2.bf16.msra.mxu0 0
  %248 = vmatprep.subr.bf16.mxu0 0
  %249 = vmatpush2.bf16.msra.mxu0 0
  %250 = vmatprep.mubr.bf16.mxu0 0
  %251 = vmatmul.mubr.bf16.gmra.mxu0 %v131
  %v252 = vpop.f32.mrf.mxu0
  %v253 = vadd.f32 0.0, %v252
  %v254 = vpop.f32.mrf.mxu0
  %v255 = vpop.f32.mrf.mxu0
  %v256 = vadd.f32 0.0, %v255
  %v257 = vpop.f32.mrf.mxu0
  %258 = vmatprep.mubr.bf16.mxu0 0
  %259 = vmatmul.mubr.bf16.gmra.mxu0 %v134
  %v260 = vpop.f32.mrf.mxu0
  %v261 = vadd.f32 0.0, %v260
  %v262 = vpop.f32.mrf.mxu0
  %v263 = vpop.f32.mrf.mxu0
  %v264 = vadd.f32 0.0, %v263
  %v265 = vpop.f32.mrf.mxu0
  %266 = vdwg.mxu0
  %s267 = scalar_lea.vmem %s1, 64
  %v268 = vld [vmem:[%s267] sm:$0xf]
  %v269 = vld [vmem:[%s267 + $0x4] sm:$0xf]
  %v270 = vld [vmem:[%s267 + $0x8] sm:$0xf]
  %v271 = vld [vmem:[%s267 + $0xc] sm:$0xf]
  %v272 = vld [vmem:[%s267 + $0x10] sm:$0xf]
  %v273 = vld [vmem:[%s267 + $0x14] sm:$0xf]
  %v274 = vld [vmem:[%s267 + $0x18] sm:$0xf]
  %v275 = vld [vmem:[%s267 + $0x1c] sm:$0xf]
  %v284 = vunpack.c.l.b16 %v268
  %v285 = vunpack.c.l.b16 %v269
  %v286 = vunpack.c.l.b16 %v270
  %v287 = vunpack.c.l.b16 %v271
  %v288 = vunpack.c.l.b16 %v272
  %v289 = vunpack.c.l.b16 %v273
  %v290 = vunpack.c.l.b16 %v274
  %v291 = vunpack.c.l.b16 %v275
  %v292 = vpack.c.b16 %v285, %v284
  %v293 = vpack.c.b16 %v287, %v286
  %v294 = vpack.c.b16 %v289, %v288
  %v295 = vpack.c.b16 %v291, %v290
  %300 = vmatprep.subr.bf16.mxu0 0
  %301 = vmatpush1.bf16.msra.mxu0 0
  %302 = vmatprep.subr.bf16.mxu0 0
  %303 = vmatpush1.bf16.msra.mxu0 0
  %304 = vmatprep.subr.bf16.mxu0 0
  %305 = vmatpush1.bf16.msra.mxu0 0
  %306 = vmatprep.subr.bf16.mxu0 0
  %307 = vmatpush1.bf16.msra.mxu0 0
  %308 = vmatprep.subr.bf16.mxu0 0
  %309 = vmatpush1.bf16.msra.mxu0 %v295
  %310 = vmatprep.subr.bf16.mxu0 0
  %311 = vmatpush1.bf16.msra.mxu0 %v294
  %312 = vmatprep.subr.bf16.mxu0 0
  %313 = vmatpush1.bf16.msra.mxu0 %v293
  %314 = vmatprep.subr.bf16.mxu0 0
  %315 = vmatpush1.bf16.msra.mxu0 %v292
  %316 = vmatprep.subr.bf16.mxu0 0
  %317 = vmatpush2.bf16.msra.mxu0 0
  %318 = vmatprep.subr.bf16.mxu0 0
  %319 = vmatpush2.bf16.msra.mxu0 0
  %320 = vmatprep.subr.bf16.mxu0 0
  %321 = vmatpush2.bf16.msra.mxu0 0
  %322 = vmatprep.subr.bf16.mxu0 0
  %323 = vmatpush2.bf16.msra.mxu0 0
  %324 = vmatprep.subr.bf16.mxu0 0
  %325 = vmatpush2.bf16.msra.mxu0 0
  %326 = vmatprep.subr.bf16.mxu0 0
  %327 = vmatpush2.bf16.msra.mxu0 0
  %328 = vmatprep.subr.bf16.mxu0 0
  %329 = vmatpush2.bf16.msra.mxu0 0
  %330 = vmatprep.subr.bf16.mxu0 0
  %331 = vmatpush2.bf16.msra.mxu0 0
  %332 = vmatprep.mubr.bf16.mxu0 0
  %333 = vmatmul.mubr.bf16.gmra.mxu0 %v131
  %v334 = vpop.f32.mrf.mxu0
  %v335 = vadd.f32 0.0, %v334
  %v336 = vpop.f32.mrf.mxu0
  %v337 = vpop.f32.mrf.mxu0
  %v338 = vadd.f32 0.0, %v337
  %v339 = vpop.f32.mrf.mxu0
  %340 = vmatprep.mubr.bf16.mxu0 0
  %341 = vmatmul.mubr.bf16.gmra.mxu0 %v134
  %v342 = vpop.f32.mrf.mxu0
  %v343 = vadd.f32 0.0, %v342
  %v344 = vpop.f32.mrf.mxu0
  %v345 = vpop.f32.mrf.mxu0
  %v346 = vadd.f32 0.0, %v345
  %v347 = vpop.f32.mrf.mxu0
  %348 = vdwg.mxu0
  %v349 = vrot.slane %v171, 7
  %v350 = vrot.slane %v174, 7
  %v351 = vrot.slane %v179, 7
  %v352 = vrot.slane %v182, 7
  %vm353 = vcmp.lt.s32.totalorder %v27, 1
  %v354 = vsel %vm353, %v351, %v352
  %v355 = vsel %vm353, %v350, %v351
  %v356 = vsel %vm353, %v349, %v350
  %v357 = vsel %vm353, %v352, %v349
  %v358 = vsel %vm79, 1, 0
  %v359 = vsel %vm80, 1, 0
  %v360 = vsel %vm81, 1, 0
  %v361 = vsel %vm82, 1, 0
  %vm362 = vcmp.eq.s32.totalorder %v358, 1
  %vm363 = vcmp.eq.s32.totalorder %v359, 1
  %vm364 = vcmp.eq.s32.totalorder %v360, 1
  %vm365 = vcmp.eq.s32.totalorder %v361, 1
  %v366 = vsel %vm362, %v357, 0.0
  %v367 = vsel %vm363, %v356, 0.0
  %v368 = vsel %vm364, %v355, 0.0
  %v369 = vsel %vm365, %v354, 0.0
  %v370 = vadd.f32 %v366, %v253
  %v371 = vadd.f32 %v367, %v256
  %v372 = vadd.f32 %v368, %v261
  %v373 = vadd.f32 %v369, %v264
  %v374 = vrot.slane %v335, 1
  %v375 = vrot.slane %v338, 1
  %v376 = vrot.slane %v343, 1
  %v377 = vrot.slane %v346, 1
  %vm378 = vcmp.lt.s32.totalorder %v27, 7
  %v379 = vsel %vm378, %v376, %v377
  %v380 = vsel %vm378, %v375, %v376
  %v381 = vsel %vm378, %v374, %v375
  %v382 = vsel %vm378, %v377, %v374
  %v383 = vsel %vm83, 1, 0
  %v384 = vsel %vm84, 1, 0
  %v385 = vsel %vm85, 1, 0
  %v386 = vsel %vm86, 1, 0
  %vm387 = vcmp.eq.s32.totalorder %v383, 1
  %vm388 = vcmp.eq.s32.totalorder %v384, 1
  %vm389 = vcmp.eq.s32.totalorder %v385, 1
  %vm390 = vcmp.eq.s32.totalorder %v386, 1
  %v391 = vsel %vm387, %v381, 0.0
  %v392 = vsel %vm388, %v380, 0.0
  %v393 = vsel %vm389, %v379, 0.0
  %v394 = vsel %vm390, %v382, 0.0
  %v395 = vadd.f32 %v370, %v391
  %v396 = vadd.f32 %v371, %v392
  %v397 = vadd.f32 %v372, %v393
  %v398 = vadd.f32 %v373, %v394
  %v399 = vlaneseq
  %v400 = vshrl.u32 %v399, 7
  %v401 = vsub.s32 0, %v400
  %v402 = vrot.slane %v25, %v401
  %v403 = vadd.f32 %v395, %v402
  %v404 = vadd.f32 %v396, %v402
  %v405 = vadd.f32 %v397, %v402
  %v406 = vadd.f32 %v398, %v402
  %v407 = vmax.f32 %v403, 0.0
  %v408 = vmax.f32 %v404, 0.0
  %v409 = vmax.f32 %v405, 0.0
  %v410 = vmax.f32 %v406, 0.0
  %v411 = vpack.c.bf16 %v408, %v407
  %v412 = vpack.c.bf16 %v410, %v409
  %v413 = vld [vmem:[%s2] sm:$0xf]
  %v414 = vld [vmem:[%s2 + $0x4] sm:$0xf]
  %v415 = vld [vmem:[%s2 + $0x8] sm:$0xf]
  %v416 = vld [vmem:[%s2 + $0xc] sm:$0xf]
  %v417 = vld [vmem:[%s2 + $0x10] sm:$0xf]
  %v418 = vld [vmem:[%s2 + $0x14] sm:$0xf]
  %v419 = vld [vmem:[%s2 + $0x18] sm:$0xf]
  %v420 = vld [vmem:[%s2 + $0x1c] sm:$0xf]
  %v421 = vld [vmem:[%s2 + $0x20] sm:$0xf]
  %v422 = vld [vmem:[%s2 + $0x24] sm:$0xf]
  %v423 = vld [vmem:[%s2 + $0x28] sm:$0xf]
  %v424 = vld [vmem:[%s2 + $0x2c] sm:$0xf]
  %v425 = vld [vmem:[%s2 + $0x30] sm:$0xf]
  %v426 = vld [vmem:[%s2 + $0x34] sm:$0xf]
  %v427 = vld [vmem:[%s2 + $0x38] sm:$0xf]
  %v428 = vld [vmem:[%s2 + $0x3c] sm:$0xf]
  %v445 = vunpack.c.l.b16 %v413
  %v446 = vunpack.c.l.b16 %v414
  %v447 = vunpack.c.l.b16 %v415
  %v448 = vunpack.c.l.b16 %v416
  %v449 = vunpack.c.l.b16 %v417
  %v450 = vunpack.c.l.b16 %v418
  %v451 = vunpack.c.l.b16 %v419
  %v452 = vunpack.c.l.b16 %v420
  %v453 = vunpack.c.l.b16 %v421
  %v454 = vunpack.c.l.b16 %v422
  %v455 = vunpack.c.l.b16 %v423
  %v456 = vunpack.c.l.b16 %v424
  %v457 = vunpack.c.l.b16 %v425
  %v458 = vunpack.c.l.b16 %v426
  %v459 = vunpack.c.l.b16 %v427
  %v460 = vunpack.c.l.b16 %v428
  %v461 = vpack.c.b16 %v446, %v445
  %v462 = vpack.c.b16 %v448, %v447
  %v463 = vpack.c.b16 %v450, %v449
  %v464 = vpack.c.b16 %v452, %v451
  %v465 = vpack.c.b16 %v454, %v453
  %v466 = vpack.c.b16 %v456, %v455
  %v467 = vpack.c.b16 %v458, %v457
  %v468 = vpack.c.b16 %v460, %v459
  %477 = vmatprep.subr.bf16.mxu0 0
  %478 = vmatpush1.bf16.msra.mxu0 %v468
  %479 = vmatprep.subr.bf16.mxu0 0
  %480 = vmatpush1.bf16.msra.mxu0 %v467
  %481 = vmatprep.subr.bf16.mxu0 0
  %482 = vmatpush1.bf16.msra.mxu0 %v466
  %483 = vmatprep.subr.bf16.mxu0 0
  %484 = vmatpush1.bf16.msra.mxu0 %v465
  %485 = vmatprep.subr.bf16.mxu0 0
  %486 = vmatpush1.bf16.msra.mxu0 %v464
  %487 = vmatprep.subr.bf16.mxu0 0
  %488 = vmatpush1.bf16.msra.mxu0 %v463
  %489 = vmatprep.subr.bf16.mxu0 0
  %490 = vmatpush1.bf16.msra.mxu0 %v462
  %491 = vmatprep.subr.bf16.mxu0 0
  %492 = vmatpush1.bf16.msra.mxu0 %v461
  %493 = vmatprep.subr.bf16.mxu0 0
  %494 = vmatpush2.bf16.msra.mxu0 0
  %495 = vmatprep.subr.bf16.mxu0 0
  %496 = vmatpush2.bf16.msra.mxu0 0
  %497 = vmatprep.subr.bf16.mxu0 0
  %498 = vmatpush2.bf16.msra.mxu0 0
  %499 = vmatprep.subr.bf16.mxu0 0
  %500 = vmatpush2.bf16.msra.mxu0 0
  %501 = vmatprep.subr.bf16.mxu0 0
  %502 = vmatpush2.bf16.msra.mxu0 0
  %503 = vmatprep.subr.bf16.mxu0 0
  %504 = vmatpush2.bf16.msra.mxu0 0
  %505 = vmatprep.subr.bf16.mxu0 0
  %506 = vmatpush2.bf16.msra.mxu0 0
  %507 = vmatprep.subr.bf16.mxu0 0
  %508 = vmatpush2.bf16.msra.mxu0 0
  %509 = vmatprep.mubr.bf16.mxu0 0
  %510 = vmatmul.mubr.bf16.gmra.mxu0 %v411
  %v511 = vpop.f32.mrf.mxu0
  %v512 = vadd.f32 0.0, %v511
  %v513 = vpop.f32.mrf.mxu0
  %v514 = vpop.f32.mrf.mxu0
  %v515 = vadd.f32 0.0, %v514
  %v516 = vpop.f32.mrf.mxu0
  %517 = vmatprep.mubr.bf16.mxu0 0
  %518 = vmatmul.mubr.bf16.gmra.mxu0 %v412
  %v519 = vpop.f32.mrf.mxu0
  %v520 = vadd.f32 0.0, %v519
  %v521 = vpop.f32.mrf.mxu0
  %v522 = vpop.f32.mrf.mxu0
  %v523 = vadd.f32 0.0, %v522
  %v524 = vpop.f32.mrf.mxu0
  %525 = vdwg.mxu0
  %s526 = scalar_lea.vmem %s2, 64
  %v527 = vld [vmem:[%s526] sm:$0xf]
  %v528 = vld [vmem:[%s526 + $0x4] sm:$0xf]
  %v529 = vld [vmem:[%s526 + $0x8] sm:$0xf]
  %v530 = vld [vmem:[%s526 + $0xc] sm:$0xf]
  %v531 = vld [vmem:[%s526 + $0x10] sm:$0xf]
  %v532 = vld [vmem:[%s526 + $0x14] sm:$0xf]
  %v533 = vld [vmem:[%s526 + $0x18] sm:$0xf]
  %v534 = vld [vmem:[%s526 + $0x1c] sm:$0xf]
  %v535 = vld [vmem:[%s526 + $0x20] sm:$0xf]
  %v536 = vld [vmem:[%s526 + $0x24] sm:$0xf]
  %v537 = vld [vmem:[%s526 + $0x28] sm:$0xf]
  %v538 = vld [vmem:[%s526 + $0x2c] sm:$0xf]
  %v539 = vld [vmem:[%s526 + $0x30] sm:$0xf]
  %v540 = vld [vmem:[%s526 + $0x34] sm:$0xf]
  %v541 = vld [vmem:[%s526 + $0x38] sm:$0xf]
  %v542 = vld [vmem:[%s526 + $0x3c] sm:$0xf]
  %v559 = vunpack.c.l.b16 %v527
  %v560 = vunpack.c.l.b16 %v528
  %v561 = vunpack.c.l.b16 %v529
  %v562 = vunpack.c.l.b16 %v530
  %v563 = vunpack.c.l.b16 %v531
  %v564 = vunpack.c.l.b16 %v532
  %v565 = vunpack.c.l.b16 %v533
  %v566 = vunpack.c.l.b16 %v534
  %v567 = vunpack.c.l.b16 %v535
  %v568 = vunpack.c.l.b16 %v536
  %v569 = vunpack.c.l.b16 %v537
  %v570 = vunpack.c.l.b16 %v538
  %v571 = vunpack.c.l.b16 %v539
  %v572 = vunpack.c.l.b16 %v540
  %v573 = vunpack.c.l.b16 %v541
  %v574 = vunpack.c.l.b16 %v542
  %v575 = vpack.c.b16 %v560, %v559
  %v576 = vpack.c.b16 %v562, %v561
  %v577 = vpack.c.b16 %v564, %v563
  %v578 = vpack.c.b16 %v566, %v565
  %v579 = vpack.c.b16 %v568, %v567
  %v580 = vpack.c.b16 %v570, %v569
  %v581 = vpack.c.b16 %v572, %v571
  %v582 = vpack.c.b16 %v574, %v573
  %591 = vmatprep.subr.bf16.mxu0 0
  %592 = vmatpush1.bf16.msra.mxu0 %v582
  %593 = vmatprep.subr.bf16.mxu0 0
  %594 = vmatpush1.bf16.msra.mxu0 %v581
  %595 = vmatprep.subr.bf16.mxu0 0
  %596 = vmatpush1.bf16.msra.mxu0 %v580
  %597 = vmatprep.subr.bf16.mxu0 0
  %598 = vmatpush1.bf16.msra.mxu0 %v579
  %599 = vmatprep.subr.bf16.mxu0 0
  %600 = vmatpush1.bf16.msra.mxu0 %v578
  %601 = vmatprep.subr.bf16.mxu0 0
  %602 = vmatpush1.bf16.msra.mxu0 %v577
  %603 = vmatprep.subr.bf16.mxu0 0
  %604 = vmatpush1.bf16.msra.mxu0 %v576
  %605 = vmatprep.subr.bf16.mxu0 0
  %606 = vmatpush1.bf16.msra.mxu0 %v575
  %607 = vmatprep.subr.bf16.mxu0 0
  %608 = vmatpush2.bf16.msra.mxu0 0
  %609 = vmatprep.subr.bf16.mxu0 0
  %610 = vmatpush2.bf16.msra.mxu0 0
  %611 = vmatprep.subr.bf16.mxu0 0
  %612 = vmatpush2.bf16.msra.mxu0 0
  %613 = vmatprep.subr.bf16.mxu0 0
  %614 = vmatpush2.bf16.msra.mxu0 0
  %615 = vmatprep.subr.bf16.mxu0 0
  %616 = vmatpush2.bf16.msra.mxu0 0
  %617 = vmatprep.subr.bf16.mxu0 0
  %618 = vmatpush2.bf16.msra.mxu0 0
  %619 = vmatprep.subr.bf16.mxu0 0
  %620 = vmatpush2.bf16.msra.mxu0 0
  %621 = vmatprep.subr.bf16.mxu0 0
  %622 = vmatpush2.bf16.msra.mxu0 0
  %623 = vmatprep.mubr.bf16.mxu0 0
  %624 = vmatmul.mubr.bf16.gmra.mxu0 %v411
  %v625 = vpop.f32.mrf.mxu0
  %v626 = vadd.f32 0.0, %v625
  %v627 = vpop.f32.mrf.mxu0
  %v628 = vpop.f32.mrf.mxu0
  %v629 = vadd.f32 0.0, %v628
  %v630 = vpop.f32.mrf.mxu0
  %631 = vmatprep.mubr.bf16.mxu0 0
  %632 = vmatmul.mubr.bf16.gmra.mxu0 %v412
  %v633 = vpop.f32.mrf.mxu0
  %v634 = vadd.f32 0.0, %v633
  %v635 = vpop.f32.mrf.mxu0
  %v636 = vpop.f32.mrf.mxu0
  %v637 = vadd.f32 0.0, %v636
  %v638 = vpop.f32.mrf.mxu0
  %639 = vdwg.mxu0
  %s640 = scalar_lea.vmem %s2, 128
  %v641 = vld [vmem:[%s640] sm:$0xf]
  %v642 = vld [vmem:[%s640 + $0x4] sm:$0xf]
  %v643 = vld [vmem:[%s640 + $0x8] sm:$0xf]
  %v644 = vld [vmem:[%s640 + $0xc] sm:$0xf]
  %v645 = vld [vmem:[%s640 + $0x10] sm:$0xf]
  %v646 = vld [vmem:[%s640 + $0x14] sm:$0xf]
  %v647 = vld [vmem:[%s640 + $0x18] sm:$0xf]
  %v648 = vld [vmem:[%s640 + $0x1c] sm:$0xf]
  %v649 = vld [vmem:[%s640 + $0x20] sm:$0xf]
  %v650 = vld [vmem:[%s640 + $0x24] sm:$0xf]
  %v651 = vld [vmem:[%s640 + $0x28] sm:$0xf]
  %v652 = vld [vmem:[%s640 + $0x2c] sm:$0xf]
  %v653 = vld [vmem:[%s640 + $0x30] sm:$0xf]
  %v654 = vld [vmem:[%s640 + $0x34] sm:$0xf]
  %v655 = vld [vmem:[%s640 + $0x38] sm:$0xf]
  %v656 = vld [vmem:[%s640 + $0x3c] sm:$0xf]
  %v673 = vunpack.c.l.b16 %v641
  %v674 = vunpack.c.l.b16 %v642
  %v675 = vunpack.c.l.b16 %v643
  %v676 = vunpack.c.l.b16 %v644
  %v677 = vunpack.c.l.b16 %v645
  %v678 = vunpack.c.l.b16 %v646
  %v679 = vunpack.c.l.b16 %v647
  %v680 = vunpack.c.l.b16 %v648
  %v681 = vunpack.c.l.b16 %v649
  %v682 = vunpack.c.l.b16 %v650
  %v683 = vunpack.c.l.b16 %v651
  %v684 = vunpack.c.l.b16 %v652
  %v685 = vunpack.c.l.b16 %v653
  %v686 = vunpack.c.l.b16 %v654
  %v687 = vunpack.c.l.b16 %v655
  %v688 = vunpack.c.l.b16 %v656
  %v689 = vpack.c.b16 %v674, %v673
  %v690 = vpack.c.b16 %v676, %v675
  %v691 = vpack.c.b16 %v678, %v677
  %v692 = vpack.c.b16 %v680, %v679
  %v693 = vpack.c.b16 %v682, %v681
  %v694 = vpack.c.b16 %v684, %v683
  %v695 = vpack.c.b16 %v686, %v685
  %v696 = vpack.c.b16 %v688, %v687
  %705 = vmatprep.subr.bf16.mxu0 0
  %706 = vmatpush1.bf16.msra.mxu0 %v696
  %707 = vmatprep.subr.bf16.mxu0 0
  %708 = vmatpush1.bf16.msra.mxu0 %v695
  %709 = vmatprep.subr.bf16.mxu0 0
  %710 = vmatpush1.bf16.msra.mxu0 %v694
  %711 = vmatprep.subr.bf16.mxu0 0
  %712 = vmatpush1.bf16.msra.mxu0 %v693
  %713 = vmatprep.subr.bf16.mxu0 0
  %714 = vmatpush1.bf16.msra.mxu0 %v692
  %715 = vmatprep.subr.bf16.mxu0 0
  %716 = vmatpush1.bf16.msra.mxu0 %v691
  %717 = vmatprep.subr.bf16.mxu0 0
  %718 = vmatpush1.bf16.msra.mxu0 %v690
  %719 = vmatprep.subr.bf16.mxu0 0
  %720 = vmatpush1.bf16.msra.mxu0 %v689
  %721 = vmatprep.subr.bf16.mxu0 0
  %722 = vmatpush2.bf16.msra.mxu0 0
  %723 = vmatprep.subr.bf16.mxu0 0
  %724 = vmatpush2.bf16.msra.mxu0 0
  %725 = vmatprep.subr.bf16.mxu0 0
  %726 = vmatpush2.bf16.msra.mxu0 0
  %727 = vmatprep.subr.bf16.mxu0 0
  %728 = vmatpush2.bf16.msra.mxu0 0
  %729 = vmatprep.subr.bf16.mxu0 0
  %730 = vmatpush2.bf16.msra.mxu0 0
  %731 = vmatprep.subr.bf16.mxu0 0
  %732 = vmatpush2.bf16.msra.mxu0 0
  %733 = vmatprep.subr.bf16.mxu0 0
  %734 = vmatpush2.bf16.msra.mxu0 0
  %735 = vmatprep.subr.bf16.mxu0 0
  %736 = vmatpush2.bf16.msra.mxu0 0
  %737 = vmatprep.mubr.bf16.mxu0 0
  %738 = vmatmul.mubr.bf16.gmra.mxu0 %v411
  %v739 = vpop.f32.mrf.mxu0
  %v740 = vadd.f32 0.0, %v739
  %v741 = vpop.f32.mrf.mxu0
  %v742 = vpop.f32.mrf.mxu0
  %v743 = vadd.f32 0.0, %v742
  %v744 = vpop.f32.mrf.mxu0
  %745 = vmatprep.mubr.bf16.mxu0 0
  %746 = vmatmul.mubr.bf16.gmra.mxu0 %v412
  %v747 = vpop.f32.mrf.mxu0
  %v748 = vadd.f32 0.0, %v747
  %v749 = vpop.f32.mrf.mxu0
  %v750 = vpop.f32.mrf.mxu0
  %v751 = vadd.f32 0.0, %v750
  %v752 = vpop.f32.mrf.mxu0
  %753 = vdwg.mxu0
  %v754 = vld [vmem:[%s3] sm:$0xf]
  %v755 = vld [vmem:[%s3 + $0x4] sm:$0xf]
  %v756 = vld [vmem:[%s3 + $0x8] sm:$0xf]
  %v757 = vld [vmem:[%s3 + $0xc] sm:$0xf]
  %v758 = vld [vmem:[%s3 + $0x10] sm:$0xf]
  %v759 = vld [vmem:[%s3 + $0x14] sm:$0xf]
  %v760 = vld [vmem:[%s3 + $0x18] sm:$0xf]
  %v761 = vld [vmem:[%s3 + $0x1c] sm:$0xf]
  %v770 = vunpack.c.l.b16 %v754
  %v771 = vunpack.c.l.b16 %v755
  %v772 = vunpack.c.l.b16 %v756
  %v773 = vunpack.c.l.b16 %v757
  %v774 = vunpack.c.l.b16 %v758
  %v775 = vunpack.c.l.b16 %v759
  %v776 = vunpack.c.l.b16 %v760
  %v777 = vunpack.c.l.b16 %v761
  %v778 = vpack.c.b16 %v771, %v770
  %v779 = vpack.c.b16 %v773, %v772
  %v780 = vpack.c.b16 %v775, %v774
  %v781 = vpack.c.b16 %v777, %v776
  %786 = vmatprep.subr.bf16.mxu0 0
  %787 = vmatpush1.bf16.msra.mxu0 0
  %788 = vmatprep.subr.bf16.mxu0 0
  %789 = vmatpush1.bf16.msra.mxu0 0
  %790 = vmatprep.subr.bf16.mxu0 0
  %791 = vmatpush1.bf16.msra.mxu0 0
  %792 = vmatprep.subr.bf16.mxu0 0
  %793 = vmatpush1.bf16.msra.mxu0 0
  %794 = vmatprep.subr.bf16.mxu0 0
  %795 = vmatpush1.bf16.msra.mxu0 %v781
  %796 = vmatprep.subr.bf16.mxu0 0
  %797 = vmatpush1.bf16.msra.mxu0 %v780
  %798 = vmatprep.subr.bf16.mxu0 0
  %799 = vmatpush1.bf16.msra.mxu0 %v779
  %800 = vmatprep.subr.bf16.mxu0 0
  %801 = vmatpush1.bf16.msra.mxu0 %v778
  %802 = vmatprep.subr.bf16.mxu0 0
  %803 = vmatpush2.bf16.msra.mxu0 0
  %804 = vmatprep.subr.bf16.mxu0 0
  %805 = vmatpush2.bf16.msra.mxu0 0
  %806 = vmatprep.subr.bf16.mxu0 0
  %807 = vmatpush2.bf16.msra.mxu0 0
  %808 = vmatprep.subr.bf16.mxu0 0
  %809 = vmatpush2.bf16.msra.mxu0 0
  %810 = vmatprep.subr.bf16.mxu0 0
  %811 = vmatpush2.bf16.msra.mxu0 0
  %812 = vmatprep.subr.bf16.mxu0 0
  %813 = vmatpush2.bf16.msra.mxu0 0
  %814 = vmatprep.subr.bf16.mxu0 0
  %815 = vmatpush2.bf16.msra.mxu0 0
  %816 = vmatprep.subr.bf16.mxu0 0
  %817 = vmatpush2.bf16.msra.mxu0 0
  %818 = vmatprep.mubr.bf16.mxu0 0
  %819 = vmatmul.mubr.bf16.gmra.mxu0 %v131
  %v820 = vpop.f32.mrf.mxu0
  %v821 = vadd.f32 0.0, %v820
  %v822 = vpop.f32.mrf.mxu0
  %v823 = vpop.f32.mrf.mxu0
  %v824 = vadd.f32 0.0, %v823
  %v825 = vpop.f32.mrf.mxu0
  %826 = vmatprep.mubr.bf16.mxu0 0
  %827 = vmatmul.mubr.bf16.gmra.mxu0 %v134
  %v828 = vpop.f32.mrf.mxu0
  %v829 = vadd.f32 0.0, %v828
  %v830 = vpop.f32.mrf.mxu0
  %v831 = vpop.f32.mrf.mxu0
  %v832 = vadd.f32 0.0, %v831
  %v833 = vpop.f32.mrf.mxu0
  %834 = vdwg.mxu0
  %v835 = vrot.slane %v512, 7
  %v836 = vrot.slane %v515, 7
  %v837 = vrot.slane %v520, 7
  %v838 = vrot.slane %v523, 7
  %v839 = vsel %vm353, %v837, %v838
  %v840 = vsel %vm353, %v836, %v837
  %v841 = vsel %vm353, %v835, %v836
  %v842 = vsel %vm353, %v838, %v835
  %v843 = vsel %vm362, %v842, 0.0
  %v844 = vsel %vm363, %v841, 0.0
  %v845 = vsel %vm364, %v840, 0.0
  %v846 = vsel %vm365, %v839, 0.0
  %v847 = vadd.f32 %v843, %v626
  %v848 = vadd.f32 %v844, %v629
  %v849 = vadd.f32 %v845, %v634
  %v850 = vadd.f32 %v846, %v637
  %v851 = vrot.slane %v740, 1
  %v852 = vrot.slane %v743, 1
  %v853 = vrot.slane %v748, 1
  %v854 = vrot.slane %v751, 1
  %v855 = vsel %vm378, %v853, %v854
  %v856 = vsel %vm378, %v852, %v853
  %v857 = vsel %vm378, %v851, %v852
  %v858 = vsel %vm378, %v854, %v851
  %v859 = vsel %vm387, %v857, 0.0
  %v860 = vsel %vm388, %v856, 0.0
  %v861 = vsel %vm389, %v855, 0.0
  %v862 = vsel %vm390, %v858, 0.0
  %v863 = vadd.f32 %v847, %v859
  %v864 = vadd.f32 %v848, %v860
  %v865 = vadd.f32 %v849, %v861
  %v866 = vadd.f32 %v850, %v862
  %v867 = vadd.f32 %v863, %v821
  %v868 = vadd.f32 %v864, %v824
  %v869 = vadd.f32 %v865, %v829
  %v870 = vadd.f32 %v866, %v832
  %v871 = vlaneseq
  %v872 = vshrl.u32 %v871, 7
  %v873 = vsub.s32 1, %v872
  %v874 = vrot.slane %v25, %v873
  %v875 = vadd.f32 %v867, %v874
  %v876 = vadd.f32 %v868, %v874
  %v877 = vadd.f32 %v869, %v874
  %v878 = vadd.f32 %v870, %v874
  %v879 = vmax.f32 %v875, 0.0
  %v880 = vmax.f32 %v876, 0.0
  %v881 = vmax.f32 %v877, 0.0
  %v882 = vmax.f32 %v878, 0.0
  %883 = vst [vmem:[%s5] sm:$0xff] %v879
  %884 = vst [vmem:[%s5 + $0x8] sm:$0xff] %v880
  %885 = vst [vmem:[%s5 + $0x10] sm:$0xff] %v881
  %886 = vst [vmem:[%s5 + $0x18] sm:$0xff] %v882
  // Predicated region
  $region22: #{resblock_pallas.1} parent=0 // pred_check
    _
  $region23: #{resblock_pallas.1} parent=0 // pred_check_branch
    %888 = sbr.rel (0) target = $region25
  $region24: #{resblock_pallas.1} parent=0 // pred_region
    _
  $region25: #{resblock_pallas.1} parent=0 // pred_fallthru
    _
  // Predicated region
  $region26: #{resblock_pallas.1} parent=0 // pred_check
    _
  $region27: #{resblock_pallas.1} parent=0 // pred_check_branch
    %890 = sbr.rel (0) target = $region29
  $region28: #{resblock_pallas.1} parent=0 // pred_region
    _
  $region29: #{resblock_pallas.1} parent=0 // pred_fallthru
    _

</llo_original>
